<compile_context>
chip_gen: v5e
topology: v5e:2x2
jax: 0.10.0
libtpu: 0.0.40
codegen_flags: <defaults>
</compile_context>

<pallas_src>
import jax
import jax.numpy as jnp
from jax.experimental import pallas as pl
from jax.experimental.pallas import tpu as pltpu


def _round_up(x, m):
    return ((x + m - 1) // m) * m


def _classify_kernel(ids_ref, table_ref, w_diff_ref, b_diff_ref, out_ref):
    # ids_ref:    (TM, 1)  int32 token ids for this tile (streamed)
    # table_ref:  (V, E)   bfloat16 encoded vocab table (VMEM-resident)
    # w_diff_ref: (1, E)   float32  (w_cls[:,1] - w_cls[:,0])
    # b_diff_ref: (1, 1)   float32  (b_cls[1]   - b_cls[0])
    # out_ref:    (TM, 2)  float32 log-probabilities
    ids = ids_ref[...]                     # (TM, 1) int32
    tm = ids.shape[0]
    v = table_ref.shape[0]

    # In-kernel gather via one-hot MXU matmul: exact for bf16 table values.
    iota_v = jax.lax.broadcasted_iota(jnp.int32, (tm, v), 1)
    onehot = (iota_v == ids).astype(jnp.float32).astype(jnp.bfloat16)   # (TM, V)
    h = jnp.dot(onehot, table_ref[...],
                preferred_element_type=jnp.float32)                     # (TM, E)

    # Classifier as a matvec (VPU mul + XLU lane-reduce; MXU stays free for gather).
    d = jnp.sum(h * w_diff_ref[...], axis=-1, keepdims=True)            # (TM, 1)
    d = d + b_diff_ref[...]                                             # (TM, 1)

    # log_softmax over 2 classes via the softplus identity (numerically stable).
    sp = jnp.maximum(d, 0.0) + jnp.log(1.0 + jnp.exp(-jnp.abs(d)))      # softplus(d)
    logp0 = -sp                                                         # class 0
    logp1 = d - sp                                                      # class 1

    mask0 = jax.lax.broadcasted_iota(jnp.int32, (tm, 2), 1) == 0
    out_ref[...] = jnp.where(mask0,
                             jnp.broadcast_to(logp0, (tm, 2)),
                             jnp.broadcast_to(logp1, (tm, 2)))


def base_model_forward(x_tokens, params, *, tm_max=512):
    """x_tokens: (B, S) int32 token ids -> (B, S, 2) float32 log-probs."""
    emb_table = params["embedding"]          # (V, E) f32
    w_enc, b_enc = params["w_enc"], params["b_enc"]
    w_cls, b_cls = params["w_cls"], params["b_cls"]

    B, S = x_tokens.shape
    V, E = emb_table.shape
    M = B * S

    # Fold the encoder into the (tiny) vocab table once — off the per-token path.
    enc_table = jnp.tanh(emb_table @ w_enc + b_enc).astype(jnp.bfloat16)   # (V, E)
    w_diff = (w_cls[:, 1] - w_cls[:, 0]).reshape(1, E).astype(jnp.float32)
    b_diff = (b_cls[0, 1] - b_cls[0, 0]).reshape(1, 1).astype(jnp.float32)
    ids = x_tokens.reshape(M, 1).astype(jnp.int32)

    # Tile the token axis; TM multiple of 8 (f32 sublane). Remainder tiles are masked.
    TM = min(tm_max, _round_up(M, 8))
    grid = (pl.cdiv(M, TM),)

    out = pl.pallas_call(
        _classify_kernel,
        out_shape=jax.ShapeDtypeStruct((M, 2), jnp.float32),
        grid_spec=pltpu.PrefetchScalarGridSpec(
            num_scalar_prefetch=0,
            grid=grid,
            in_specs=[
                pl.BlockSpec((TM, 1), lambda i: (i, 0)),   # token ids (streamed)
                pl.BlockSpec((V, E), lambda i: (0, 0)),    # encoded table (resident)
                pl.BlockSpec((1, E), lambda i: (0, 0)),    # w_diff (resident)
                pl.BlockSpec((1, 1), lambda i: (0, 0)),    # b_diff (resident)
            ],
            out_specs=pl.BlockSpec((TM, 2), lambda i: (i, 0)),
        ),
        compiler_params=pltpu.CompilerParams(
            dimension_semantics=("parallel",)),
    )(ids, enc_table, w_diff, b_diff)

    return out.reshape(B, S, 2)


# --- pure-JAX reference (same math, for correctness check) ---
def reference_forward(x_tokens, params):
    emb_table = params["embedding"]
    w_enc, b_enc = params["w_enc"], params["b_enc"]
    w_cls, b_cls = params["w_cls"], params["b_cls"]
    B, S = x_tokens.shape
    enc_table = jnp.tanh(emb_table @ w_enc + b_enc).astype(jnp.bfloat16).astype(jnp.float32)
    rows = jnp.take(enc_table, x_tokens.reshape(-1), axis=0)
    z = rows @ w_cls + b_cls
    return jax.nn.log_softmax(z, axis=-1).reshape(B, S, 2)


# --- dependent metric helpers (plain-JAX glue, mirror the torch semantics) ---
def get_mean_max_prob(probs):
    # probs: (B, S, 2) -> scalar: mean over (B, S) of max over class dim
    return float(jnp.mean(jnp.max(probs, axis=2)))


def label_variance(probs):
    # Mirrors the (buggy) torch version: returns variance (unbiased) of
    # probs[last_batch, :, 0].
    last = probs[-1, :, 0]
    return float(jnp.var(last, ddof=1))


def init_params(key, vocab_size, embedding_size):
    k1, k2, k3, k4, k5 = jax.random.split(key, 5)
    scale = 1.0 / jnp.sqrt(embedding_size)
    return {
        "embedding": jax.random.normal(k1, (vocab_size, embedding_size),
                                       jnp.float32) * 0.1,
        "w_enc": jax.random.normal(k2, (embedding_size, embedding_size),
                                   jnp.float32) * scale,
        "b_enc": jax.random.normal(k3, (1, embedding_size), jnp.float32) * 0.01,
        "w_cls": jax.random.normal(k4, (embedding_size, 2),
                                   jnp.float32) * scale,
        "b_cls": jax.random.normal(k5, (1, 2), jnp.float32) * 0.01,
    }


if __name__ == "__main__":
    # Small shapes implied by the forward docstring: x is (batch, seq_len).
    batch, seq_len = 2, 8
    vocab_size, embedding_size = 64, 32

    key = jax.random.PRNGKey(0)
    kp, kx = jax.random.split(key)
    params = init_params(kp, vocab_size, embedding_size)
    x = jax.random.randint(kx, (batch, seq_len), 0, vocab_size, jnp.int32)

    fwd = jax.jit(base_model_forward)
    logits = fwd(x, params)                       # (2, 8, 2) log-probs
    jax.block_until_ready(logits)

    # correctness: log-probs exponentiate to a distribution and match reference
    probs = jnp.exp(logits)
    ref = reference_forward(x, params)
    assert logits.shape == (batch, seq_len, 2)
    assert bool(jnp.allclose(jnp.sum(probs, axis=-1), 1.0, atol=1e-5))
    assert bool(jnp.allclose(logits, ref, atol=2e-3, rtol=2e-3))

    _ = get_mean_max_prob(probs)
    _ = label_variance(probs)

    print("KERNEL_OK")
</pallas_src>

<mosaic_0001>
module attributes {stable_mosaic.version = 11 : i64} {
  func.func @_classify_kernel(%arg0: i32, %arg1: memref<16x1xi32, #tpu.memory_space<vmem>>, %arg2: memref<64x32xbf16, #tpu.memory_space<vmem>>, %arg3: memref<1x32xf32, #tpu.memory_space<vmem>>, %arg4: memref<1x1xf32, #tpu.memory_space<vmem>>, %arg5: memref<16x2xf32, #tpu.memory_space<vmem>>) attributes {dimension_semantics = [#tpu.dimension_semantics<parallel>], iteration_bounds = array<i64: 1>, scalar_prefetch = 0 : i64, scratch_operands = 0 : i64, tpu.core_type = #tpu.core_type<tc>, window_params = [{transform_indices = @transform_0, window_bounds = array<i64: 16, 1>}, {pipeline_mode = #tpu.pipeline_mode<synchronous>, transform_indices = @transform_1, window_bounds = array<i64: 64, 32>}, {pipeline_mode = #tpu.pipeline_mode<synchronous>, transform_indices = @transform_2, window_bounds = array<i64: 1, 32>}, {pipeline_mode = #tpu.pipeline_mode<synchronous>, transform_indices = @transform_3, window_bounds = array<i64: 1, 1>}, {transform_indices = @transform_4, window_bounds = array<i64: 16, 2>}]} {
    %c0 = arith.constant 0 : index
    %c0_0 = arith.constant 0 : index
    %0 = vector.load %arg1[%c0, %c0_0] : memref<16x1xi32, #tpu.memory_space<vmem>>, vector<16x1xi32>
    %1 = tpu.iota {dimensions = array<i32: 1>} : vector<16x64xi32>
    %2 = vector.broadcast %0 : vector<16x1xi32> to vector<16x64xi32>
    %3 = arith.cmpi eq, %1, %2 : vector<16x64xi32>
    %4 = arith.extui %3 : vector<16x64xi1> to vector<16x64xi32>
    %5 = arith.sitofp %4 : vector<16x64xi32> to vector<16x64xf32>
    %6 = arith.truncf %5 : vector<16x64xf32> to vector<16x64xbf16>
    %c0_1 = arith.constant 0 : index
    %c0_2 = arith.constant 0 : index
    %7 = vector.load %arg2[%c0_1, %c0_2] : memref<64x32xbf16, #tpu.memory_space<vmem>>, vector<64x32xbf16>
    %cst = arith.constant dense<0.000000e+00> : vector<16x32xf32>
    %8 = tpu.matmul %6, %7, %cst {dimension_numbers = #tpu.dot_dimension_numbers<[1], [0], [0], [1], [0, 0, 1, 1], [], []>} : vector<16x64xbf16>, vector<64x32xbf16>, vector<16x32xf32> -> vector<16x32xf32>
    %c0_3 = arith.constant 0 : index
    %c0_4 = arith.constant 0 : index
    %9 = vector.load %arg3[%c0_3, %c0_4] : memref<1x32xf32, #tpu.memory_space<vmem>>, vector<1x32xf32>
    %10 = vector.broadcast %9 : vector<1x32xf32> to vector<16x32xf32>
    %11 = arith.mulf %8, %10 : vector<16x32xf32>
    %cst_5 = arith.constant dense<0.000000e+00> : vector<16xf32>
    %12 = vector.multi_reduction <add>, %11, %cst_5 [1] : vector<16x32xf32> to vector<16xf32>
    %13 = vector.shape_cast %12 : vector<16xf32> to vector<16x1xf32>
    %c0_6 = arith.constant 0 : index
    %c0_7 = arith.constant 0 : index
    %14 = vector.load %arg4[%c0_6, %c0_7] : memref<1x1xf32, #tpu.memory_space<vmem>>, vector<1x1xf32>
    %15 = vector.broadcast %14 : vector<1x1xf32> to vector<16x1xf32>
    %16 = arith.addf %13, %15 : vector<16x1xf32>
    %cst_8 = arith.constant 0.000000e+00 : f32
    %17 = vector.broadcast %cst_8 : f32 to vector<16x1xf32>
    %18 = arith.maximumf %16, %17 : vector<16x1xf32>
    %19 = math.absf %16 : vector<16x1xf32>
    %cst_9 = arith.constant 0.000000e+00 : f32
    %20 = vector.broadcast %cst_9 : f32 to vector<16x1xf32>
    %21 = arith.subf %20, %19 : vector<16x1xf32>
    %22 = math.exp %21 : vector<16x1xf32>
    %cst_10 = arith.constant 1.000000e+00 : f32
    %23 = vector.broadcast %cst_10 : f32 to vector<16x1xf32>
    %24 = arith.addf %23, %22 : vector<16x1xf32>
    %25 = math.log %24 : vector<16x1xf32>
    %26 = arith.addf %18, %25 : vector<16x1xf32>
    %cst_11 = arith.constant 0.000000e+00 : f32
    %27 = vector.broadcast %cst_11 : f32 to vector<16x1xf32>
    %28 = arith.subf %27, %26 : vector<16x1xf32>
    %29 = arith.subf %16, %26 : vector<16x1xf32>
    %30 = tpu.iota {dimensions = array<i32: 1>} : vector<16x2xi32>
    %c0_i32 = arith.constant 0 : i32
    %31 = vector.broadcast %c0_i32 : i32 to vector<16x2xi32>
    %32 = arith.cmpi eq, %30, %31 : vector<16x2xi32>
    %33 = vector.shape_cast %28 : vector<16x1xf32> to vector<16x1xf32>
    %34 = vector.broadcast %33 : vector<16x1xf32> to vector<16x2xf32>
    %35 = vector.shape_cast %29 : vector<16x1xf32> to vector<16x1xf32>
    %36 = vector.broadcast %35 : vector<16x1xf32> to vector<16x2xf32>
    %37 = arith.select %32, %34, %36 : vector<16x2xi1>, vector<16x2xf32>
    %c0_12 = arith.constant 0 : index
    %c0_13 = arith.constant 0 : index
    %38 = vector.load %arg5[%c0_12, %c0_13] : memref<16x2xf32, #tpu.memory_space<vmem>>, vector<16x2xf32>
    tpu.vector_store %arg5[%c0_12, %c0_13], %37 {strides = array<i32>} : memref<16x2xf32, #tpu.memory_space<vmem>>, vector<16x2xf32>,
    return
  }
  func.func @transform_0(%arg0: i32) -> (i32, i32) {
    %c0_i32 = arith.constant 0 : i32
    %c0_i32_0 = arith.constant 0 : i32
    return %arg0, %c0_i32 : i32, i32
  }
  func.func @transform_1(%arg0: i32) -> (i32, i32) {
    %c0_i32 = arith.constant 0 : i32
    %c0_i32_0 = arith.constant 0 : i32
    %c0_i32_1 = arith.constant 0 : i32
    return %c0_i32, %c0_i32_0 : i32, i32
  }
  func.func @transform_2(%arg0: i32) -> (i32, i32) {
    %c0_i32 = arith.constant 0 : i32
    %c0_i32_0 = arith.constant 0 : i32
    %c0_i32_1 = arith.constant 0 : i32
    return %c0_i32, %c0_i32_0 : i32, i32
  }
  func.func @transform_3(%arg0: i32) -> (i32, i32) {
    %c0_i32 = arith.constant 0 : i32
    %c0_i32_0 = arith.constant 0 : i32
    %c0_i32_1 = arith.constant 0 : i32
    return %c0_i32, %c0_i32_0 : i32, i32
  }
  func.func @transform_4(%arg0: i32) -> (i32, i32) {
    %c0_i32 = arith.constant 0 : i32
    %c0_i32_0 = arith.constant 0 : i32
    return %arg0, %c0_i32 : i32, i32
  }
}

</mosaic_0001>

<llo_original>
// kernel: base_model_forward.1
$region0: #{base_model_forward.1}
  #allocation0 [shape = 'u32[]', space=smem, size = 0x4, offset = 0x4, fixed_abs, tag = 'smem constant byte address 0x4 - core index']
  #allocation1 [shape = 'u32[72,128]{1,0:T(1,128)}', space=vmem, size = 0x9000, scoped, tag = 'internal scratch']
  #allocation2 [shape = 'f32[1,1]{1,0:T(1,128)S(1)}', space=vmem, size = 0x200, scoped, tag = 'scoped memory for base_model_forward.1']
  %s0 = inlined_call_operand.vmem [shape: s32[16,1], index: 0, kind: input, shape index: {}]
  %s1 = inlined_call_operand.vmem [shape: bf16[64,32], index: 1, kind: input, shape index: {}]
  %s2 = inlined_call_operand.vmem [shape: f32[1,32], index: 2, kind: input, shape index: {}]
  %s3 = inlined_call_operand.<no memory space> [shape: f32[1,1], index: 3, kind: input, shape index: {}]
  %s4 = inlined_call_operand.vmem [shape: f32[16,2], index: 4, kind: output, shape index: {}]
  %s5 = sld [smem:[#allocation0]]
  $region26: #{base_model_forward.1} parent=0
    _
  %s7 = ssub.s32 1, %s5
  %s8 = scalar_select 0, %s7, %s5
  %v9 = vstv %s3
  %10 = vst [vmem:[#allocation2] sm:$0x1] %v9
  // Predicated region
  $region2: #{base_model_forward.1} parent=0 // pred_check
    _
  $region3: #{base_model_forward.1} parent=0 // pred_check_branch
    %12 = sbr.rel (0) target = $region5
  $region4: #{base_model_forward.1} parent=0 // pred_region
    _
  $region5: #{base_model_forward.1} parent=0 // pred_fallthru
    _
  // Predicated region
  $region6: #{base_model_forward.1} parent=0 // pred_check
    _
  $region7: #{base_model_forward.1} parent=0 // pred_check_branch
    %14 = sbr.rel (0) target = $region9
  $region8: #{base_model_forward.1} parent=0 // pred_region
    _
  $region9: #{base_model_forward.1} parent=0 // pred_fallthru
    _
  // Predicated region
  $region10: #{base_model_forward.1} parent=0 // pred_check
    _
  $region11: #{base_model_forward.1} parent=0 // pred_check_branch
    %16 = sbr.rel (0) target = $region13
  $region12: #{base_model_forward.1} parent=0 // pred_region
    _
  $region13: #{base_model_forward.1} parent=0 // pred_fallthru
    _
  // Predicated region
  $region14: #{base_model_forward.1} parent=0 // pred_check
    _
  $region15: #{base_model_forward.1} parent=0 // pred_check_branch
    %18 = sbr.rel (0) target = $region17
  $region16: #{base_model_forward.1} parent=0 // pred_region
    _
  $region17: #{base_model_forward.1} parent=0 // pred_fallthru
    _
  %v20 = vld [vmem:[%s0] sm:$0xff]
  %v21 = vld [vmem:[%s0 + $0x8] sm:$0xff]
  %v22 = vlaneseq
  %v23 = vand.u32 %v22, 127
  %24 = vset.pattern.permute.xlu0 0
  %25 = vperm.xlu0 %24, %v20
  %v26 = vpop.permute.xlu0 %25
  %27 = vset.pattern.permute.xlu0 0
  %28 = vperm.xlu0 %27, %v21
  %v29 = vpop.permute.xlu0 %28
  %vm30 = vcmp.eq.s32.totalorder %v23, %v26
  %vm31 = vcmp.eq.s32.totalorder %v23, %v29
  %v32 = vsel %vm30, 1, 0
  %v33 = vsel %vm31, 1, 0
  %v34 = vcvt.s32.f32 %v32
  %v35 = vcvt.s32.f32 %v33
  %v36 = vpack.c.bf16 %v35, %v34
  %v37 = vld [vmem:[%s1] sm:$0xf]
  %v38 = vld [vmem:[%s1 + $0x4] sm:$0xf]
  %v39 = vld [vmem:[%s1 + $0x8] sm:$0xf]
  %v40 = vld [vmem:[%s1 + $0xc] sm:$0xf]
  %v41 = vld [vmem:[%s1 + $0x10] sm:$0xf]
  %v42 = vld [vmem:[%s1 + $0x14] sm:$0xf]
  %v43 = vld [vmem:[%s1 + $0x18] sm:$0xf]
  %v44 = vld [vmem:[%s1 + $0x1c] sm:$0xf]
  %v53 = vunpack.c.l.b16 %v37
  %v54 = vunpack.c.l.b16 %v38
  %v55 = vunpack.c.l.b16 %v39
  %v56 = vunpack.c.l.b16 %v40
  %v57 = vunpack.c.l.b16 %v41
  %v58 = vunpack.c.l.b16 %v42
  %v59 = vunpack.c.l.b16 %v43
  %v60 = vunpack.c.l.b16 %v44
  %v61 = vpack.c.b16 %v54, %v53
  %v62 = vpack.c.b16 %v56, %v55
  %v63 = vpack.c.b16 %v58, %v57
  %v64 = vpack.c.b16 %v60, %v59
  %vm69 = vcmask 523264
  %v71 = vsel %vm69, %v36, 0
  %73 = vmatpush.bf16.msra.mxu0 0
  %74 = vmatpush.bf16.msra.mxu0 0
  %75 = vmatpush.bf16.msra.mxu0 0
  %76 = vmatpush.bf16.msra.mxu0 0
  %77 = vmatpush.bf16.msra.mxu0 %v64
  %78 = vmatpush.bf16.msra.mxu0 %v63
  %79 = vmatpush.bf16.msra.mxu0 %v62
  %80 = vmatpush.bf16.msra.mxu0 %v61
  %81 = vmatmul.bf16.gmra.mxu0 %v71
  %v82 = vpop.f32.mrf.mxu0
  %v83 = vadd.f32 0.0, %v82
  %v84 = vpop.f32.mrf.mxu0
  %v85 = vadd.f32 0.0, %v84
  %86 = vdwg.mxu0
  %v87 = vld [vmem:[%s2] sm:$0x1]
  %v89 = vperm.slane %v87, 0
  %v91 = vmul.f32 %v83, %v89
  %v92 = vmul.f32 %v85, %v89
  %vm93 = vcmask 261120
  %v94 = vsel %vm93, %v91, 0.0
  %95 = vadd.xlane.f32.xlu0 %v94
  %v96 = vpop.xlane.xlu0 %95
  %v97 = vsel %vm93, %v92, 0.0
  %98 = vadd.xlane.f32.xlu0 %v97
  %v99 = vpop.xlane.xlu0 %98
  %v100 = vld [vmem:[#allocation2] sm:$0x1]
  %v102 = vperm.slane %v100, 0
  %v104 = vadd.f32 %v96, %v102
  %v105 = vadd.f32 %v99, %v102
  %v106 = vmax.f32 %v104, 0.0
  %v107 = vmax.f32 %v105, 0.0
  %v108 = vand.u32 2147483647, %v104
  %v109 = vand.u32 2147483647, %v105
  %v110 = vsub.f32 0.0, %v108
  %v111 = vsub.f32 0.0, %v109
  %v112 = vmul.f32 %v110, 1.442695
  %v113 = vpow.pop %v112
  %v114 = vmul.f32 %v111, 1.442695
  %v115 = vpow.pop %v114
  %v116 = vadd.f32 %v113, 1.0
  %v117 = vadd.f32 %v115, 1.0
  %v118 = vlog2.pop %v116
  %v119 = vmul.f32 %v118, 0.6931472
  %v120 = vlog2.pop %v117
  %v121 = vmul.f32 %v120, 0.6931472
  %v122 = vadd.f32 %v106, %v119
  %v123 = vadd.f32 %v107, %v121
  %v124 = vsub.f32 0.0, %v122
  %v125 = vsub.f32 0.0, %v123
  %v126 = vsub.f32 %v104, %v122
  %v127 = vsub.f32 %v105, %v123
  %vm128 = vcmp.eq.s32.totalorder %v23, 0
  %130 = vset.pattern.permute.xlu0 0
  %131 = vperm.xlu0 %130, %v124
  %v132 = vpop.permute.xlu0 %131
  %135 = vset.pattern.permute.xlu0 0
  %136 = vperm.xlu0 %135, %v125
  %v137 = vpop.permute.xlu0 %136
  %140 = vset.pattern.permute.xlu0 0
  %141 = vperm.xlu0 %140, %v126
  %v142 = vpop.permute.xlu0 %141
  %145 = vset.pattern.permute.xlu0 0
  %146 = vperm.xlu0 %145, %v127
  %v147 = vpop.permute.xlu0 %146
  %v149 = vsel %vm128, %v132, %v142
  %v150 = vsel %vm128, %v137, %v147
  %vm151 = vcmask 15360
  %152 = vst.msk [vmem:[%s4] sm:$0xff] %vm151, %v149
  %153 = vst.msk [vmem:[%s4 + $0x8] sm:$0xff] %vm151, %v150
  // Predicated region
  $region18: #{base_model_forward.1} parent=0 // pred_check
    _
  $region19: #{base_model_forward.1} parent=0 // pred_check_branch
    %155 = sbr.rel (0) target = $region21
  $region20: #{base_model_forward.1} parent=0 // pred_region
    _
  $region21: #{base_model_forward.1} parent=0 // pred_fallthru
    _
  // Predicated region
  $region22: #{base_model_forward.1} parent=0 // pred_check
    _
  $region23: #{base_model_forward.1} parent=0 // pred_check_branch
    %157 = sbr.rel (0) target = $region25
  $region24: #{base_model_forward.1} parent=0 // pred_region
    _
  $region25: #{base_model_forward.1} parent=0 // pred_fallthru
    _

</llo_original>
